<compile_context>
chip_gen: v5e
topology: v5e:2x2
jax: 0.10.0
libtpu: 0.0.40
codegen_flags: <defaults>
</compile_context>

<pallas_src>
import jax
import jax.numpy as jnp
from jax.experimental import pallas as pl
from jax.experimental.pallas import tpu as pltpu

NUM_HIGHWAY_LAYERS = 3


def mcan_cb_kernel(x_ref, w1_ref, b1_ref, whw_ref, bhw_ref, w2_ref, b2_ref,
                   out_ref):
    """One batch tile of the fused decoder.

    x_ref  : [tb, input_dim]          (f32)
    w1_ref : [input_dim, mid] (bf16)   b1_ref : [1, mid]      (f32)
    whw_ref: [3, mid, 2*mid]  (bf16)   bhw_ref: [3, 1, 2*mid] (f32)
             columns [:mid] = gate linear, [mid:] = nonlinear linear
    w2_ref : [1, mid]         (f32)    b2_ref : [1, 1]        (f32)
    out_ref: [tb, 1]                  (f32)
    """
    mid = w1_ref.shape[-1]

    # nn.Linear(input_dim, mid) -> ReLU -> Dropout(identity)
    x = x_ref[...].astype(jnp.bfloat16)
    h = jnp.maximum(
        jnp.dot(x, w1_ref[...], preferred_element_type=jnp.float32)
        + b1_ref[...],
        0.0)

    # Highway(mid, num_layers=3, f=relu): fused gate+nonlinear matmul per layer
    for l in range(NUM_HIGHWAY_LAYERS):
        z = jnp.dot(h.astype(jnp.bfloat16), whw_ref[l],
                    preferred_element_type=jnp.float32) + bhw_ref[l]
        gate = jax.nn.sigmoid(z[:, :mid])
        nonlinear = jnp.maximum(z[:, mid:], 0.0)
        # gate*nonlinear + (1-gate)*h  ==  h + gate*(nonlinear - h)
        h = h + gate * (nonlinear - h)

    # Dropout(identity) -> nn.Linear(mid, 1) -> Sigmoid
    # N=1 projection done as a lane reduce on the VPU/XLU instead of the MXU.
    logit = jnp.sum(h * w2_ref[...], axis=-1, keepdims=True) + b2_ref[...]
    out_ref[...] = jax.nn.sigmoid(logit).astype(out_ref.dtype)


def init_params(key, input_dim, mid):
    """PyTorch-style (uniform) initialization, f32, un-fused layout."""
    ks = jax.random.split(key, 8)
    s_in = 1.0 / jnp.sqrt(jnp.float32(input_dim))
    s_mid = 1.0 / jnp.sqrt(jnp.float32(mid))
    return {
        "w1": jax.random.uniform(ks[0], (input_dim, mid), jnp.float32, -s_in, s_in),
        "b1": jax.random.uniform(ks[1], (1, mid), jnp.float32, -s_in, s_in),
        "wg": jax.random.uniform(ks[2], (NUM_HIGHWAY_LAYERS, mid, mid),
                                 jnp.float32, -s_mid, s_mid),
        "bg": jax.random.uniform(ks[3], (NUM_HIGHWAY_LAYERS, 1, mid),
                                 jnp.float32, -s_mid, s_mid),
        "wn": jax.random.uniform(ks[4], (NUM_HIGHWAY_LAYERS, mid, mid),
                                 jnp.float32, -s_mid, s_mid),
        "bn": jax.random.uniform(ks[5], (NUM_HIGHWAY_LAYERS, 1, mid),
                                 jnp.float32, -s_mid, s_mid),
        "w2": jax.random.uniform(ks[6], (mid, 1), jnp.float32, -s_mid, s_mid),
        "b2": jax.random.uniform(ks[7], (1, 1), jnp.float32, -s_mid, s_mid),
    }


def prepare_params(params):
    """Fuse highway gate/nonlinear weights and cast matmul operands to bf16."""
    whw = jnp.concatenate([params["wg"], params["wn"]], axis=-1)  # [3, mid, 2*mid]
    bhw = jnp.concatenate([params["bg"], params["bn"]], axis=-1)  # [3, 1, 2*mid]
    return {
        "w1": params["w1"].astype(jnp.bfloat16),
        "b1": params["b1"],                       # f32 (added post-accumulation)
        "whw": whw.astype(jnp.bfloat16),
        "bhw": bhw,                               # f32
        "w2_row": params["w2"].reshape(1, -1),    # [1, mid], f32 (VPU reduce)
        "b2": params["b2"],                       # [1, 1], f32
    }


def mcan_cb_forward(q_d, fused, *, tile_b=512):
    B, input_dim = q_d.shape
    mid = fused["w1"].shape[-1]

    # Batch tile: multiple of 8 sublanes, capped at tile_b; pad B up to a
    # multiple of the tile so BlockSpec shapes divide evenly.
    tb = min(tile_b, max(8, B))
    tb = ((tb + 7) // 8) * 8
    Bp = pl.cdiv(B, tb) * tb
    if Bp != B:
        q_d = jnp.pad(q_d, ((0, Bp - B), (0, 0)))

    resident2 = lambda i: (0, 0)
    resident3 = lambda i: (0, 0, 0)

    prob = pl.pallas_call(
        mcan_cb_kernel,
        out_shape=jax.ShapeDtypeStruct((Bp, 1), jnp.float32),
        grid=(Bp // tb,),
        in_specs=[
            pl.BlockSpec((tb, input_dim), lambda i: (i, 0)),                  # x tile
            pl.BlockSpec((input_dim, mid), resident2),                        # w1
            pl.BlockSpec((1, mid), resident2),                                # b1
            pl.BlockSpec((NUM_HIGHWAY_LAYERS, mid, 2 * mid), resident3),      # whw
            pl.BlockSpec((NUM_HIGHWAY_LAYERS, 1, 2 * mid), resident3),        # bhw
            pl.BlockSpec((1, mid), resident2),                                # w2_row
            pl.BlockSpec((1, 1), resident2),                                  # b2
        ],
        out_specs=pl.BlockSpec((tb, 1), lambda i: (i, 0)),
        compiler_params=pltpu.CompilerParams(
            dimension_semantics=("parallel",)),
    )(q_d, fused["w1"], fused["b1"], fused["whw"], fused["bhw"],
      fused["w2_row"], fused["b2"])

    # prob[:, 0] exactly as in the PyTorch forward (drop batch padding).
    return prob[:B, 0]


def mcan_cb_reference(q_d, params):
    """Pure-JAX f32 reference for correctness checking."""
    h = jnp.maximum(q_d @ params["w1"] + params["b1"], 0.0)
    for l in range(NUM_HIGHWAY_LAYERS):
        gate = jax.nn.sigmoid(h @ params["wg"][l] + params["bg"][l])
        nonlinear = jnp.maximum(h @ params["wn"][l] + params["bn"][l], 0.0)
        h = gate * nonlinear + (1.0 - gate) * h
    prob = jax.nn.sigmoid(h @ params["w2"] + params["b2"])
    return prob[:, 0]


if __name__ == "__main__":
    B, INPUT_DIM, MID = 8, 32, 32   # small shapes consistent with the module

    key = jax.random.PRNGKey(0)
    k_params, k_x = jax.random.split(key)
    params = init_params(k_params, INPUT_DIM, MID)
    fused = prepare_params(params)
    q_d = jax.random.normal(k_x, (B, INPUT_DIM), jnp.float32)

    out = mcan_cb_forward(q_d, fused)
    out = jax.block_until_ready(out)

    ref = mcan_cb_reference(q_d, params)
    assert out.shape == (B,)
    # bf16 MXU operands (f32 accumulation) -> loosened tolerance vs f32 ref.
    assert jnp.allclose(out, ref, atol=3e-2, rtol=3e-2), (out, ref)

    print("KERNEL_OK")
</pallas_src>

<mosaic_0001>
module attributes {stable_mosaic.version = 11 : i64} {
  func.func @mcan_cb_kernel(%arg0: i32, %arg1: memref<8x32xf32, #tpu.memory_space<vmem>>, %arg2: memref<32x32xbf16, #tpu.memory_space<vmem>>, %arg3: memref<1x32xf32, #tpu.memory_space<vmem>>, %arg4: memref<3x32x64xbf16, #tpu.memory_space<vmem>>, %arg5: memref<3x1x64xf32, #tpu.memory_space<vmem>>, %arg6: memref<1x32xf32, #tpu.memory_space<vmem>>, %arg7: memref<1x1xf32, #tpu.memory_space<vmem>>, %arg8: memref<8x1xf32, #tpu.memory_space<vmem>>) attributes {dimension_semantics = [#tpu.dimension_semantics<parallel>], iteration_bounds = array<i64: 1>, scalar_prefetch = 0 : i64, scratch_operands = 0 : i64, tpu.core_type = #tpu.core_type<tc>, window_params = [{transform_indices = @transform_0, window_bounds = array<i64: 8, 32>}, {pipeline_mode = #tpu.pipeline_mode<synchronous>, transform_indices = @transform_1, window_bounds = array<i64: 32, 32>}, {pipeline_mode = #tpu.pipeline_mode<synchronous>, transform_indices = @transform_2, window_bounds = array<i64: 1, 32>}, {pipeline_mode = #tpu.pipeline_mode<synchronous>, transform_indices = @transform_3, window_bounds = array<i64: 3, 32, 64>}, {pipeline_mode = #tpu.pipeline_mode<synchronous>, transform_indices = @transform_4, window_bounds = array<i64: 3, 1, 64>}, {pipeline_mode = #tpu.pipeline_mode<synchronous>, transform_indices = @transform_5, window_bounds = array<i64: 1, 32>}, {pipeline_mode = #tpu.pipeline_mode<synchronous>, transform_indices = @transform_6, window_bounds = array<i64: 1, 1>}, {transform_indices = @transform_7, window_bounds = array<i64: 8, 1>}]} {
    %c0 = arith.constant 0 : index
    %c0_0 = arith.constant 0 : index
    %0 = vector.load %arg1[%c0, %c0_0] : memref<8x32xf32, #tpu.memory_space<vmem>>, vector<8x32xf32>
    %1 = arith.truncf %0 : vector<8x32xf32> to vector<8x32xbf16>
    %c0_1 = arith.constant 0 : index
    %c0_2 = arith.constant 0 : index
    %2 = vector.load %arg2[%c0_1, %c0_2] : memref<32x32xbf16, #tpu.memory_space<vmem>>, vector<32x32xbf16>
    %cst = arith.constant dense<0.000000e+00> : vector<8x32xf32>
    %3 = tpu.matmul %1, %2, %cst {dimension_numbers = #tpu.dot_dimension_numbers<[1], [0], [0], [1], [0, 0, 1, 1], [], []>} : vector<8x32xbf16>, vector<32x32xbf16>, vector<8x32xf32> -> vector<8x32xf32>
    %c0_3 = arith.constant 0 : index
    %c0_4 = arith.constant 0 : index
    %4 = vector.load %arg3[%c0_3, %c0_4] : memref<1x32xf32, #tpu.memory_space<vmem>>, vector<1x32xf32>
    %5 = vector.broadcast %4 : vector<1x32xf32> to vector<8x32xf32>
    %6 = arith.addf %3, %5 : vector<8x32xf32>
    %cst_5 = arith.constant 0.000000e+00 : f32
    %7 = vector.broadcast %cst_5 : f32 to vector<8x32xf32>
    %8 = arith.maximumf %6, %7 : vector<8x32xf32>
    %9 = arith.truncf %8 : vector<8x32xf32> to vector<8x32xbf16>
    %c0_6 = arith.constant 0 : index
    %c0_7 = arith.constant 0 : index
    %c0_8 = arith.constant 0 : index
    %10 = vector.load %arg4[%c0_6, %c0_7, %c0_8] : memref<3x32x64xbf16, #tpu.memory_space<vmem>>, vector<1x32x64xbf16>
    %11 = vector.shape_cast %10 : vector<1x32x64xbf16> to vector<32x64xbf16>
    %cst_9 = arith.constant dense<0.000000e+00> : vector<8x64xf32>
    %12 = tpu.matmul %9, %11, %cst_9 {dimension_numbers = #tpu.dot_dimension_numbers<[1], [0], [0], [1], [0, 0, 1, 1], [], []>} : vector<8x32xbf16>, vector<32x64xbf16>, vector<8x64xf32> -> vector<8x64xf32>
    %c0_10 = arith.constant 0 : index
    %c0_11 = arith.constant 0 : index
    %c0_12 = arith.constant 0 : index
    %13 = vector.load %arg5[%c0_10, %c0_11, %c0_12] : memref<3x1x64xf32, #tpu.memory_space<vmem>>, vector<1x1x64xf32>
    %14 = vector.shape_cast %13 : vector<1x1x64xf32> to vector<1x64xf32>
    %15 = vector.broadcast %14 : vector<1x64xf32> to vector<8x64xf32>
    %16 = arith.addf %12, %15 : vector<8x64xf32>
    %17 = vector.extract_strided_slice %16 {offsets = [0, 0], sizes = [8, 32], strides = [1, 1]} : vector<8x64xf32> to vector<8x32xf32>
    %18 = arith.negf %17 : vector<8x32xf32>
    %19 = math.exp %18 : vector<8x32xf32>
    %cst_13 = arith.constant 1.000000e+00 : f32
    %20 = vector.broadcast %cst_13 : f32 to vector<8x32xf32>
    %21 = arith.addf %20, %19 : vector<8x32xf32>
    %22 = arith.divf %20, %21 : vector<8x32xf32>
    %23 = vector.extract_strided_slice %16 {offsets = [0, 32], sizes = [8, 32], strides = [1, 1]} : vector<8x64xf32> to vector<8x32xf32>
    %cst_14 = arith.constant 0.000000e+00 : f32
    %24 = vector.broadcast %cst_14 : f32 to vector<8x32xf32>
    %25 = arith.maximumf %23, %24 : vector<8x32xf32>
    %26 = arith.subf %25, %8 : vector<8x32xf32>
    %27 = arith.mulf %22, %26 : vector<8x32xf32>
    %28 = arith.addf %8, %27 : vector<8x32xf32>
    %29 = arith.truncf %28 : vector<8x32xf32> to vector<8x32xbf16>
    %c1 = arith.constant 1 : index
    %c0_15 = arith.constant 0 : index
    %c0_16 = arith.constant 0 : index
    %30 = vector.load %arg4[%c1, %c0_15, %c0_16] : memref<3x32x64xbf16, #tpu.memory_space<vmem>>, vector<1x32x64xbf16>
    %31 = vector.shape_cast %30 : vector<1x32x64xbf16> to vector<32x64xbf16>
    %cst_17 = arith.constant dense<0.000000e+00> : vector<8x64xf32>
    %32 = tpu.matmul %29, %31, %cst_17 {dimension_numbers = #tpu.dot_dimension_numbers<[1], [0], [0], [1], [0, 0, 1, 1], [], []>} : vector<8x32xbf16>, vector<32x64xbf16>, vector<8x64xf32> -> vector<8x64xf32>
    %c1_18 = arith.constant 1 : index
    %c0_19 = arith.constant 0 : index
    %c0_20 = arith.constant 0 : index
    %33 = vector.load %arg5[%c1_18, %c0_19, %c0_20] : memref<3x1x64xf32, #tpu.memory_space<vmem>>, vector<1x1x64xf32>
    %34 = vector.shape_cast %33 : vector<1x1x64xf32> to vector<1x64xf32>
    %35 = vector.broadcast %34 : vector<1x64xf32> to vector<8x64xf32>
    %36 = arith.addf %32, %35 : vector<8x64xf32>
    %37 = vector.extract_strided_slice %36 {offsets = [0, 0], sizes = [8, 32], strides = [1, 1]} : vector<8x64xf32> to vector<8x32xf32>
    %38 = arith.negf %37 : vector<8x32xf32>
    %39 = math.exp %38 : vector<8x32xf32>
    %cst_21 = arith.constant 1.000000e+00 : f32
    %40 = vector.broadcast %cst_21 : f32 to vector<8x32xf32>
    %41 = arith.addf %40, %39 : vector<8x32xf32>
    %42 = arith.divf %40, %41 : vector<8x32xf32>
    %43 = vector.extract_strided_slice %36 {offsets = [0, 32], sizes = [8, 32], strides = [1, 1]} : vector<8x64xf32> to vector<8x32xf32>
    %cst_22 = arith.constant 0.000000e+00 : f32
    %44 = vector.broadcast %cst_22 : f32 to vector<8x32xf32>
    %45 = arith.maximumf %43, %44 : vector<8x32xf32>
    %46 = arith.subf %45, %28 : vector<8x32xf32>
    %47 = arith.mulf %42, %46 : vector<8x32xf32>
    %48 = arith.addf %28, %47 : vector<8x32xf32>
    %49 = arith.truncf %48 : vector<8x32xf32> to vector<8x32xbf16>
    %c2 = arith.constant 2 : index
    %c0_23 = arith.constant 0 : index
    %c0_24 = arith.constant 0 : index
    %50 = vector.load %arg4[%c2, %c0_23, %c0_24] : memref<3x32x64xbf16, #tpu.memory_space<vmem>>, vector<1x32x64xbf16>
    %51 = vector.shape_cast %50 : vector<1x32x64xbf16> to vector<32x64xbf16>
    %cst_25 = arith.constant dense<0.000000e+00> : vector<8x64xf32>
    %52 = tpu.matmul %49, %51, %cst_25 {dimension_numbers = #tpu.dot_dimension_numbers<[1], [0], [0], [1], [0, 0, 1, 1], [], []>} : vector<8x32xbf16>, vector<32x64xbf16>, vector<8x64xf32> -> vector<8x64xf32>
    %c2_26 = arith.constant 2 : index
    %c0_27 = arith.constant 0 : index
    %c0_28 = arith.constant 0 : index
    %53 = vector.load %arg5[%c2_26, %c0_27, %c0_28] : memref<3x1x64xf32, #tpu.memory_space<vmem>>, vector<1x1x64xf32>
    %54 = vector.shape_cast %53 : vector<1x1x64xf32> to vector<1x64xf32>
    %55 = vector.broadcast %54 : vector<1x64xf32> to vector<8x64xf32>
    %56 = arith.addf %52, %55 : vector<8x64xf32>
    %57 = vector.extract_strided_slice %56 {offsets = [0, 0], sizes = [8, 32], strides = [1, 1]} : vector<8x64xf32> to vector<8x32xf32>
    %58 = arith.negf %57 : vector<8x32xf32>
    %59 = math.exp %58 : vector<8x32xf32>
    %cst_29 = arith.constant 1.000000e+00 : f32
    %60 = vector.broadcast %cst_29 : f32 to vector<8x32xf32>
    %61 = arith.addf %60, %59 : vector<8x32xf32>
    %62 = arith.divf %60, %61 : vector<8x32xf32>
    %63 = vector.extract_strided_slice %56 {offsets = [0, 32], sizes = [8, 32], strides = [1, 1]} : vector<8x64xf32> to vector<8x32xf32>
    %cst_30 = arith.constant 0.000000e+00 : f32
    %64 = vector.broadcast %cst_30 : f32 to vector<8x32xf32>
    %65 = arith.maximumf %63, %64 : vector<8x32xf32>
    %66 = arith.subf %65, %48 : vector<8x32xf32>
    %67 = arith.mulf %62, %66 : vector<8x32xf32>
    %68 = arith.addf %48, %67 : vector<8x32xf32>
    %c0_31 = arith.constant 0 : index
    %c0_32 = arith.constant 0 : index
    %69 = vector.load %arg6[%c0_31, %c0_32] : memref<1x32xf32, #tpu.memory_space<vmem>>, vector<1x32xf32>
    %70 = vector.broadcast %69 : vector<1x32xf32> to vector<8x32xf32>
    %71 = arith.mulf %68, %70 : vector<8x32xf32>
    %cst_33 = arith.constant dense<0.000000e+00> : vector<8xf32>
    %72 = vector.multi_reduction <add>, %71, %cst_33 [1] : vector<8x32xf32> to vector<8xf32>
    %73 = vector.shape_cast %72 : vector<8xf32> to vector<8x1xf32>
    %c0_34 = arith.constant 0 : index
    %c0_35 = arith.constant 0 : index
    %74 = vector.load %arg7[%c0_34, %c0_35] : memref<1x1xf32, #tpu.memory_space<vmem>>, vector<1x1xf32>
    %75 = vector.broadcast %74 : vector<1x1xf32> to vector<8x1xf32>
    %76 = arith.addf %73, %75 : vector<8x1xf32>
    %77 = arith.negf %76 : vector<8x1xf32>
    %78 = math.exp %77 : vector<8x1xf32>
    %cst_36 = arith.constant 1.000000e+00 : f32
    %79 = vector.broadcast %cst_36 : f32 to vector<8x1xf32>
    %80 = arith.addf %79, %78 : vector<8x1xf32>
    %81 = arith.divf %79, %80 : vector<8x1xf32>
    %c0_37 = arith.constant 0 : index
    %c0_38 = arith.constant 0 : index
    %82 = vector.load %arg8[%c0_37, %c0_38] : memref<8x1xf32, #tpu.memory_space<vmem>>, vector<8x1xf32>
    tpu.vector_store %arg8[%c0_37, %c0_38], %81 {strides = array<i32>} : memref<8x1xf32, #tpu.memory_space<vmem>>, vector<8x1xf32>,
    return
  }
  func.func @transform_0(%arg0: i32) -> (i32, i32) {
    %c0_i32 = arith.constant 0 : i32
    %c0_i32_0 = arith.constant 0 : i32
    return %arg0, %c0_i32 : i32, i32
  }
  func.func @transform_1(%arg0: i32) -> (i32, i32) {
    %c0_i32 = arith.constant 0 : i32
    %c0_i32_0 = arith.constant 0 : i32
    %c0_i32_1 = arith.constant 0 : i32
    return %c0_i32, %c0_i32_0 : i32, i32
  }
  func.func @transform_2(%arg0: i32) -> (i32, i32) {
    %c0_i32 = arith.constant 0 : i32
    %c0_i32_0 = arith.constant 0 : i32
    %c0_i32_1 = arith.constant 0 : i32
    return %c0_i32, %c0_i32_0 : i32, i32
  }
  func.func @transform_3(%arg0: i32) -> (i32, i32, i32) {
    %c0_i32 = arith.constant 0 : i32
    %c0_i32_0 = arith.constant 0 : i32
    %c0_i32_1 = arith.constant 0 : i32
    %c0_i32_2 = arith.constant 0 : i32
    return %c0_i32, %c0_i32_0, %c0_i32_1 : i32, i32, i32
  }
  func.func @transform_4(%arg0: i32) -> (i32, i32, i32) {
    %c0_i32 = arith.constant 0 : i32
    %c0_i32_0 = arith.constant 0 : i32
    %c0_i32_1 = arith.constant 0 : i32
    %c0_i32_2 = arith.constant 0 : i32
    return %c0_i32, %c0_i32_0, %c0_i32_1 : i32, i32, i32
  }
  func.func @transform_5(%arg0: i32) -> (i32, i32) {
    %c0_i32 = arith.constant 0 : i32
    %c0_i32_0 = arith.constant 0 : i32
    %c0_i32_1 = arith.constant 0 : i32
    return %c0_i32, %c0_i32_0 : i32, i32
  }
  func.func @transform_6(%arg0: i32) -> (i32, i32) {
    %c0_i32 = arith.constant 0 : i32
    %c0_i32_0 = arith.constant 0 : i32
    %c0_i32_1 = arith.constant 0 : i32
    return %c0_i32, %c0_i32_0 : i32, i32
  }
  func.func @transform_7(%arg0: i32) -> (i32, i32) {
    %c0_i32 = arith.constant 0 : i32
    %c0_i32_0 = arith.constant 0 : i32
    return %arg0, %c0_i32 : i32, i32
  }
}

</mosaic_0001>

<llo_original>
// kernel: tpu_custom_call.1
$region0: #{tpu_custom_call.1}
  #allocation0 [shape = 'u32[]', space=smem, size = 0x4, offset = 0x4, fixed_abs, tag = 'smem constant byte address 0x4 - core index']
  #allocation1 [shape = 'u32[72,128]{1,0:T(1,128)}', space=vmem, size = 0x9000, scoped, tag = 'internal scratch']
  #allocation2 [shape = 'f32[1,1]{1,0:T(1,128)S(1)}', space=vmem, size = 0x200, scoped, tag = 'scoped memory for tpu_custom_call.1']
  %s0 = inlined_call_operand.hbm [shape: f32[8,32], index: 0, kind: input, shape index: {}]
  %s1 = inlined_call_operand.hbm [shape: bf16[32,32], index: 1, kind: input, shape index: {}]
  %s2 = inlined_call_operand.vmem [shape: f32[1,32], index: 2, kind: input, shape index: {}]
  %s3 = inlined_call_operand.hbm [shape: bf16[3,32,64], index: 3, kind: input, shape index: {}]
  %s4 = inlined_call_operand.vmem [shape: f32[3,1,64], index: 4, kind: input, shape index: {}]
  %s5 = inlined_call_operand.vmem [shape: f32[1,32], index: 5, kind: input, shape index: {}]
  %s6 = inlined_call_operand.<no memory space> [shape: f32[1,1], index: 6, kind: input, shape index: {}]
  %s7 = inlined_call_operand.vmem [shape: f32[8,1], index: 7, kind: output, shape index: {}]
  %s8 = sld [smem:[#allocation0]]
  $region50: #{tpu_custom_call.1} parent=0
    _
  %s10 = ssub.s32 1, %s8
  %s11 = scalar_select 0, %s10, %s8
  %v12 = vstv %s6
  %13 = vst [vmem:[#allocation2] sm:$0x1] %v12
  $region1: #{tpu_custom_call.1} parent=0
    #allocation3 [shape = 'u8[4096]{0}', space=vmem, size = 0x1000, scoped, tag = 'input window, operand 0, single buffered']
    #allocation4 [shape = 's32[1]{0}', space=sflag, size = 0x4, scoped, tag = 'scoped memory for tpu_custom_call.1']
    #allocation5 [shape = 'u8[8192]{0}', space=vmem, size = 0x2000, scoped, tag = 'input window, operand 1, single buffered']
    #allocation6 [shape = 's32[1]{0}', space=sflag, size = 0x4, scoped, tag = 'scoped memory for tpu_custom_call.1']
    #allocation7 [shape = 'u8[24576]{0}', space=vmem, size = 0x6000, scoped, tag = 'input window, operand 3, single buffered']
    %14 = vsyncpa [#allocation4], 0
    %15 = vsyncpa [#allocation6], 0
    // Predicated region
    $region2: #{tpu_custom_call.1} parent=1 // pred_check
      _
    $region3: #{tpu_custom_call.1} parent=1 // pred_check_branch
      %17 = sbr.rel (0) target = $region5
    $region4: #{tpu_custom_call.1} parent=1 // pred_region
      %19 = vsyncadd [#allocation4], 0
      %s21 = sshll.u32 %s0, 4
      %s22 = int_to_ptr.hbm [resolvable:$true] %s21
      %s23 = sshll.u32 [#allocation3], 4
      %s24 = int_to_ptr.vmem [resolvable:$true] %s23
      %26 = dma.hbm_to_vmem [thread:$0]  %s22, 128, %s24, [#allocation4]
    $region5: #{tpu_custom_call.1} parent=1 // pred_fallthru
      _
    // Predicated region
    $region6: #{tpu_custom_call.1} parent=1 // pred_check
      _
    $region7: #{tpu_custom_call.1} parent=1 // pred_check_branch
      %28 = sbr.rel (0) target = $region9
    $region8: #{tpu_custom_call.1} parent=1 // pred_region
      %30 = vsyncadd [#allocation6], 0
      %s31 = sshll.u32 %s1, 4
      %s32 = int_to_ptr.hbm [resolvable:$true] %s31
      %s33 = sshll.u32 [#allocation5], 4
      %s34 = int_to_ptr.vmem [resolvable:$true] %s33
      %39 = dma.hbm_to_vmem [thread:$0]  %s32, 256, %s34, [#allocation6], 64, 64, 4
    $region9: #{tpu_custom_call.1} parent=1 // pred_fallthru
      _
    // Predicated region
    $region10: #{tpu_custom_call.1} parent=1 // pred_check
      _
    $region11: #{tpu_custom_call.1} parent=1 // pred_check_branch
      %41 = sbr.rel (0) target = $region13
    $region12: #{tpu_custom_call.1} parent=1 // pred_region
      _
    $region13: #{tpu_custom_call.1} parent=1 // pred_fallthru
      _
    // Predicated region
    $region14: #{tpu_custom_call.1} parent=1 // pred_check
      _
    $region15: #{tpu_custom_call.1} parent=1 // pred_check_branch
      %43 = sbr.rel (0) target = $region17
    $region16: #{tpu_custom_call.1} parent=1 // pred_region
      %45 = vsyncadd [#allocation6], 0
      %s46 = sshll.u32 %s3, 4
      %s47 = int_to_ptr.hbm [resolvable:$true] %s46
      %s48 = sshll.u32 [#allocation7], 4
      %s49 = int_to_ptr.vmem [resolvable:$true] %s48
      %54 = dma.hbm_to_vmem [thread:$0]  %s47, 768, %s49, [#allocation6], 64, 64, 4
    $region17: #{tpu_custom_call.1} parent=1 // pred_fallthru
      _
    // Predicated region
    $region18: #{tpu_custom_call.1} parent=1 // pred_check
      _
    $region19: #{tpu_custom_call.1} parent=1 // pred_check_branch
      %56 = sbr.rel (0) target = $region21
    $region20: #{tpu_custom_call.1} parent=1 // pred_region
      _
    $region21: #{tpu_custom_call.1} parent=1 // pred_fallthru
      _
    // Predicated region
    $region22: #{tpu_custom_call.1} parent=1 // pred_check
      _
    $region23: #{tpu_custom_call.1} parent=1 // pred_check_branch
      %58 = sbr.rel (0) target = $region25
    $region24: #{tpu_custom_call.1} parent=1 // pred_region
      _
    $region25: #{tpu_custom_call.1} parent=1 // pred_fallthru
      _
    // Predicated region
    $region26: #{tpu_custom_call.1} parent=1 // pred_check
      _
    $region27: #{tpu_custom_call.1} parent=1 // pred_check_branch
      %60 = sbr.rel (0) target = $region29
    $region28: #{tpu_custom_call.1} parent=1 // pred_region
      _
    $region29: #{tpu_custom_call.1} parent=1 // pred_fallthru
      _
    // Predicated region
    $region30: #{tpu_custom_call.1} parent=1 // pred_check
      _
    $region31: #{tpu_custom_call.1} parent=1 // pred_check_branch
      %62 = sbr.rel (0) target = $region33
    $region32: #{tpu_custom_call.1} parent=1 // pred_region
      %64 = dma.done [#allocation4], 128
    $region33: #{tpu_custom_call.1} parent=1 // pred_fallthru
      _
    // Predicated region
    $region34: #{tpu_custom_call.1} parent=1 // pred_check
      _
    $region35: #{tpu_custom_call.1} parent=1 // pred_check_branch
      %66 = sbr.rel (0) target = $region37
    $region36: #{tpu_custom_call.1} parent=1 // pred_region
      %68 = dma.done [#allocation6], 256
    $region37: #{tpu_custom_call.1} parent=1 // pred_fallthru
      _
    // Predicated region
    $region38: #{tpu_custom_call.1} parent=1 // pred_check
      _
    $region39: #{tpu_custom_call.1} parent=1 // pred_check_branch
      %70 = sbr.rel (0) target = $region41
    $region40: #{tpu_custom_call.1} parent=1 // pred_region
      %72 = dma.done [#allocation6], 768
    $region41: #{tpu_custom_call.1} parent=1 // pred_fallthru
      _
    %v74 = vld [vmem:[#allocation3] sm:$0xff]
    %v75 = vpack.c.bf16 %v74, %v74
    %v76 = vld [vmem:[#allocation5] sm:$0xf]
    %v77 = vld [vmem:[#allocation5 + $0x4] sm:$0xf]
    %v78 = vld [vmem:[#allocation5 + $0x8] sm:$0xf]
    %v79 = vld [vmem:[#allocation5 + $0xc] sm:$0xf]
    %v80 = vld [vmem:[%s2] sm:$0x1]
    %v82 = vperm.slane %v80, 0
    %v88 = vunpack.c.l.b16 %v76
    %v89 = vunpack.c.l.b16 %v77
    %v90 = vunpack.c.l.b16 %v78
    %v91 = vunpack.c.l.b16 %v79
    %v92 = vpack.c.b16 %v89, %v88
    %v93 = vpack.c.b16 %v91, %v90
    %vm96 = vcmask 261120
    %v98 = vsel %vm96, %v75, 0
    %100 = vmatpush.bf16.msra.mxu0 0
    %101 = vmatpush.bf16.msra.mxu0 0
    %102 = vmatpush.bf16.msra.mxu0 0
    %103 = vmatpush.bf16.msra.mxu0 0
    %104 = vmatpush.bf16.msra.mxu0 0
    %105 = vmatpush.bf16.msra.mxu0 0
    %106 = vmatpush.bf16.msra.mxu0 %v93
    %107 = vmatpush.bf16.msra.mxu0 %v92
    %108 = vmatmul.bf16.gmra.mxu0 %v98
    %v109 = vpop.f32.mrf.mxu0
    %v110 = vadd.f32 %v82, %v109
    %v111 = vpop.f32.mrf.mxu0
    %112 = vdwg.mxu0
    %v113 = vmax.f32 %v110, 0.0
    %v114 = vpack.c.bf16 %v113, %v113
    %v115 = vld [vmem:[#allocation7] sm:$0xf]
    %v116 = vld [vmem:[#allocation7 + $0x4] sm:$0xf]
    %v117 = vld [vmem:[#allocation7 + $0x8] sm:$0xf]
    %v118 = vld [vmem:[#allocation7 + $0xc] sm:$0xf]
    %v119 = vld [vmem:[%s4] sm:$0x1]
    %v121 = vperm.slane %v119, 0
    %v127 = vunpack.c.l.b16 %v115
    %v128 = vunpack.c.l.b16 %v116
    %v129 = vunpack.c.l.b16 %v117
    %v130 = vunpack.c.l.b16 %v118
    %v131 = vpack.c.b16 %v128, %v127
    %v132 = vpack.c.b16 %v130, %v129
    %v136 = vsel %vm96, %v114, 0
    %138 = vmatpush.bf16.msra.mxu0 0
    %139 = vmatpush.bf16.msra.mxu0 0
    %140 = vmatpush.bf16.msra.mxu0 0
    %141 = vmatpush.bf16.msra.mxu0 0
    %142 = vmatpush.bf16.msra.mxu0 0
    %143 = vmatpush.bf16.msra.mxu0 0
    %144 = vmatpush.bf16.msra.mxu0 %v132
    %145 = vmatpush.bf16.msra.mxu0 %v131
    %146 = vmatmul.bf16.gmra.mxu0 %v136
    %v147 = vpop.f32.mrf.mxu0
    %v148 = vadd.f32 %v121, %v147
    %v149 = vpop.f32.mrf.mxu0
    %150 = vdwg.mxu0
    %v151 = vxor.u32 %v148, 2147483648
    %v152 = vmul.f32 %v151, 1.442695
    %v153 = vpow.pop %v152
    %v154 = vadd.f32 %v153, 1.0
    %v155 = vrcp.pop %v154
    %v156 = vmul.f32 %v154, %v155
    %v157 = vsub.f32 1.0, %v156
    %v158 = vmul.f32 %v155, %v157
    %v159 = vadd.f32 %v155, %v158
    %vm160 = vweird.f32 %v154
    %vm161 = vweird.f32 %v155
    %vm162 = vmor %vm160, %vm161
    %v163 = vsel %vm162, %v155, %v159
    %v164 = vand.u32 2147483647, %v154
    %vm165 = vcmp.eq.f32.partialorder %v164, 8.507059e+37
    %v166 = vand.u32 %v154, 2147483648
    %v167 = vor.u32 1.1754944e-38, %v166
    %v168 = vsel %vm165, %v167, %v163
    %v169 = vmul.f32 1.0, %v168
    %v170 = vmax.f32 %v148, 0.0
    %172 = vrot.lane.b32.xlu0 %v113, 32
    %v173 = vpop.permute.xlu0 %172
    %v175 = vsub.f32 %v170, %v173
    %177 = vrot.lane.b32.xlu0 %v175, 96
    %v178 = vpop.permute.xlu0 %177
    %v180 = vmul.f32 %v169, %v178
    %v181 = vadd.f32 %v113, %v180
    %v182 = vpack.c.bf16 %v181, %v181
    %s183 = scalar_lea.vmem [#allocation7], 16
    %v184 = vld [vmem:[%s183] sm:$0xf]
    %v185 = vld [vmem:[%s183 + $0x4] sm:$0xf]
    %v186 = vld [vmem:[%s183 + $0x8] sm:$0xf]
    %v187 = vld [vmem:[%s183 + $0xc] sm:$0xf]
    %s188 = scalar_lea.vmem %s4, 1
    %v189 = vld [vmem:[%s188] sm:$0x1]
    %v191 = vperm.slane %v189, 0
    %v197 = vunpack.c.l.b16 %v184
    %v198 = vunpack.c.l.b16 %v185
    %v199 = vunpack.c.l.b16 %v186
    %v200 = vunpack.c.l.b16 %v187
    %v201 = vpack.c.b16 %v198, %v197
    %v202 = vpack.c.b16 %v200, %v199
    %v206 = vsel %vm96, %v182, 0
    %208 = vmatpush.bf16.msra.mxu0 0
    %209 = vmatpush.bf16.msra.mxu0 0
    %210 = vmatpush.bf16.msra.mxu0 0
    %211 = vmatpush.bf16.msra.mxu0 0
    %212 = vmatpush.bf16.msra.mxu0 0
    %213 = vmatpush.bf16.msra.mxu0 0
    %214 = vmatpush.bf16.msra.mxu0 %v202
    %215 = vmatpush.bf16.msra.mxu0 %v201
    %216 = vmatmul.bf16.gmra.mxu0 %v206
    %v217 = vpop.f32.mrf.mxu0
    %v218 = vadd.f32 %v191, %v217
    %v219 = vpop.f32.mrf.mxu0
    %220 = vdwg.mxu0
    %v221 = vxor.u32 %v218, 2147483648
    %v222 = vmul.f32 %v221, 1.442695
    %v223 = vpow.pop %v222
    %v224 = vadd.f32 %v223, 1.0
    %v225 = vrcp.pop %v224
    %v226 = vmul.f32 %v224, %v225
    %v227 = vsub.f32 1.0, %v226
    %v228 = vmul.f32 %v225, %v227
    %v229 = vadd.f32 %v225, %v228
    %vm230 = vweird.f32 %v224
    %vm231 = vweird.f32 %v225
    %vm232 = vmor %vm230, %vm231
    %v233 = vsel %vm232, %v225, %v229
    %v234 = vand.u32 2147483647, %v224
    %vm235 = vcmp.eq.f32.partialorder %v234, 8.507059e+37
    %v236 = vand.u32 %v224, 2147483648
    %v237 = vor.u32 1.1754944e-38, %v236
    %v238 = vsel %vm235, %v237, %v233
    %v239 = vmul.f32 1.0, %v238
    %v240 = vmax.f32 %v218, 0.0
    %242 = vrot.lane.b32.xlu0 %v181, 32
    %v243 = vpop.permute.xlu0 %242
    %v245 = vsub.f32 %v240, %v243
    %247 = vrot.lane.b32.xlu0 %v245, 96
    %v248 = vpop.permute.xlu0 %247
    %v250 = vmul.f32 %v239, %v248
    %v251 = vadd.f32 %v181, %v250
    %v252 = vpack.c.bf16 %v251, %v251
    %s253 = scalar_lea.vmem [#allocation7], 32
    %v254 = vld [vmem:[%s253] sm:$0xf]
    %v255 = vld [vmem:[%s253 + $0x4] sm:$0xf]
    %v256 = vld [vmem:[%s253 + $0x8] sm:$0xf]
    %v257 = vld [vmem:[%s253 + $0xc] sm:$0xf]
    %s258 = scalar_lea.vmem %s4, 2
    %v259 = vld [vmem:[%s258] sm:$0x1]
    %v261 = vperm.slane %v259, 0
    %v267 = vunpack.c.l.b16 %v254
    %v268 = vunpack.c.l.b16 %v255
    %v269 = vunpack.c.l.b16 %v256
    %v270 = vunpack.c.l.b16 %v257
    %v271 = vpack.c.b16 %v268, %v267
    %v272 = vpack.c.b16 %v270, %v269
    %v276 = vsel %vm96, %v252, 0
    %278 = vmatpush.bf16.msra.mxu0 0
    %279 = vmatpush.bf16.msra.mxu0 0
    %280 = vmatpush.bf16.msra.mxu0 0
    %281 = vmatpush.bf16.msra.mxu0 0
    %282 = vmatpush.bf16.msra.mxu0 0
    %283 = vmatpush.bf16.msra.mxu0 0
    %284 = vmatpush.bf16.msra.mxu0 %v272
    %285 = vmatpush.bf16.msra.mxu0 %v271
    %286 = vmatmul.bf16.gmra.mxu0 %v276
    %v287 = vpop.f32.mrf.mxu0
    %v288 = vadd.f32 %v261, %v287
    %v289 = vpop.f32.mrf.mxu0
    %290 = vdwg.mxu0
    %v291 = vxor.u32 %v288, 2147483648
    %v292 = vmul.f32 %v291, 1.442695
    %v293 = vpow.pop %v292
    %v294 = vadd.f32 %v293, 1.0
    %v295 = vrcp.pop %v294
    %v296 = vmul.f32 %v294, %v295
    %v297 = vsub.f32 1.0, %v296
    %v298 = vmul.f32 %v295, %v297
    %v299 = vadd.f32 %v295, %v298
    %vm300 = vweird.f32 %v294
    %vm301 = vweird.f32 %v295
    %vm302 = vmor %vm300, %vm301
    %v303 = vsel %vm302, %v295, %v299
    %v304 = vand.u32 2147483647, %v294
    %vm305 = vcmp.eq.f32.partialorder %v304, 8.507059e+37
    %v306 = vand.u32 %v294, 2147483648
    %v307 = vor.u32 1.1754944e-38, %v306
    %v308 = vsel %vm305, %v307, %v303
    %v309 = vmul.f32 1.0, %v308
    %v310 = vmax.f32 %v288, 0.0
    %312 = vrot.lane.b32.xlu0 %v251, 32
    %v313 = vpop.permute.xlu0 %312
    %v315 = vsub.f32 %v310, %v313
    %317 = vrot.lane.b32.xlu0 %v315, 96
    %v318 = vpop.permute.xlu0 %317
    %v320 = vmul.f32 %v309, %v318
    %v321 = vadd.f32 %v251, %v320
    %v322 = vld [vmem:[%s5] sm:$0x1]
    %v324 = vperm.slane %v322, 0
    %v326 = vmul.f32 %v321, %v324
    %v327 = vsel %vm96, %v326, 0.0
    %328 = vadd.xlane.f32.xlu0 %v327
    %v329 = vpop.xlane.xlu0 %328
    %v330 = vld [vmem:[#allocation2] sm:$0x1]
    %v332 = vperm.slane %v330, 0
    %v334 = vadd.f32 %v329, %v332
    %v335 = vxor.u32 %v334, 2147483648
    %v336 = vmul.f32 %v335, 1.442695
    %v337 = vpow.pop %v336
    %v338 = vadd.f32 %v337, 1.0
    %v339 = vrcp.pop %v338
    %v340 = vmul.f32 %v338, %v339
    %v341 = vsub.f32 1.0, %v340
    %v342 = vmul.f32 %v339, %v341
    %v343 = vadd.f32 %v339, %v342
    %vm344 = vweird.f32 %v338
    %vm345 = vweird.f32 %v339
    %vm346 = vmor %vm344, %vm345
    %v347 = vsel %vm346, %v339, %v343
    %v348 = vand.u32 2147483647, %v338
    %vm349 = vcmp.eq.f32.partialorder %v348, 8.507059e+37
    %v350 = vand.u32 %v338, 2147483648
    %v351 = vor.u32 1.1754944e-38, %v350
    %v352 = vsel %vm349, %v351, %v347
    %v353 = vmul.f32 1.0, %v352
    %vm354 = vcmask 7168
    %355 = vst.msk [vmem:[%s7] sm:$0xff] %vm354, %v353
    // Predicated region
    $region42: #{tpu_custom_call.1} parent=1 // pred_check
      _
    $region43: #{tpu_custom_call.1} parent=1 // pred_check_branch
      %357 = sbr.rel (0) target = $region45
    $region44: #{tpu_custom_call.1} parent=1 // pred_region
      _
    $region45: #{tpu_custom_call.1} parent=1 // pred_fallthru
      _
    // Predicated region
    $region46: #{tpu_custom_call.1} parent=1 // pred_check
      _
    $region47: #{tpu_custom_call.1} parent=1 // pred_check_branch
      %359 = sbr.rel (0) target = $region49
    $region48: #{tpu_custom_call.1} parent=1 // pred_region
      _
    $region49: #{tpu_custom_call.1} parent=1 // pred_fallthru
      _
    %360 = vsyncpa [#allocation4], 1
    %361 = vsyncpa [#allocation6], 1

</llo_original>
